<compile_context>
chip_gen: v7x
topology: tpu7x:2x2x1
jax: 0.10.0
libtpu: 0.0.40
codegen_flags: <defaults>
</compile_context>

<pallas_src>
import functools

import jax
import jax.numpy as jnp
from jax.experimental import pallas as pl
from jax.experimental.pallas import tpu as pltpu


EPS = 1e-6


def _layer_norm_f32(x, alpha, beta, hidden):
    """torch-style LayerNormalization: alpha * (x - mean) / (std + eps) + beta."""
    mean = jnp.mean(x, axis=-1, keepdims=True)
    diff = x - mean
    # torch.std is unbiased (Bessel correction, / (N - 1))
    var = jnp.sum(diff * diff, axis=-1, keepdims=True) * (1.0 / (hidden - 1))
    # per-row reciprocal on the EUP, then a single per-element multiply
    inv = pl.reciprocal(jnp.sqrt(var) + EPS, approx=True)
    return diff * (alpha * inv) + beta


def _decoder_kernel(ln_ab_ref, x_ref, w_ref, b_ref, o_ref, *, hidden, num_layers):
    """One row-tile of the Decoder forward.

    ln_ab_ref : SMEM (2 * (num_layers + 1),) f32  -> [alpha, bias] per layer + final
    x_ref     : VMEM (tile_m, hidden)              input rows
    w_ref     : VMEM (num_layers, hidden, hidden)  bf16, grid-invariant
    b_ref     : VMEM (num_layers, 1, hidden)       f32, grid-invariant
    o_ref     : VMEM (tile_m, hidden)              output rows
    """
    x = x_ref[...].astype(jnp.float32)

    # Stand-in decoder layers: pre-norm residual Linear blocks (static unroll).
    for l in range(num_layers):
        alpha = ln_ab_ref[2 * l]
        beta = ln_ab_ref[2 * l + 1]
        y = _layer_norm_f32(x, alpha, beta, hidden)
        # bf16 operands on the MXU, f32 accumulation.
        z = jnp.dot(y.astype(jnp.bfloat16), w_ref[l],
                    preferred_element_type=jnp.float32) + b_ref[l]
        x = x + z  # residual (no dropout: Decoder forward has none)

    # Final LayerNormalization of the Decoder.
    alpha = ln_ab_ref[2 * num_layers]
    beta = ln_ab_ref[2 * num_layers + 1]
    o_ref[...] = _layer_norm_f32(x, alpha, beta, hidden).astype(o_ref.dtype)


def _round_up(a, b):
    return (a + b - 1) // b * b


def decoder_forward(x, encoder_output, src_mask, tgt_mask, ln_ab, w, b, *,
                    tile_m=256):
    """Decoder.forward: x -> stand-in layers -> final LayerNormalization.

    x      : (batch, seq, hidden)
    ln_ab  : (num_layers + 1, 2)  [alpha, bias] per stand-in layer + final norm
    w, b   : (num_layers, hidden, hidden), (num_layers, hidden)
    """
    # TODO(synk): encoder_output / src_mask / tgt_mask are consumed by the real
    # (opaque) decoder layers; the stand-in row-wise blocks here do not use them.
    del encoder_output, src_mask, tgt_mask

    batch, seq, hidden = x.shape
    num_layers = w.shape[0]
    rows = batch * seq
    assert hidden >= 2, "unbiased std needs hidden >= 2 (divides by hidden - 1)"

    # Sublane-aligned row tile; pad rows up to a tile multiple (sliced off below).
    tile_m = min(tile_m, _round_up(rows, 8))
    rows_p = _round_up(rows, tile_m)

    x2d = x.reshape(rows, hidden)
    if rows_p != rows:
        x2d = jnp.pad(x2d, ((0, rows_p - rows), (0, 0)))

    ln_flat = ln_ab.astype(jnp.float32).reshape(-1)       # 1-D -> tiny SMEM footprint
    w_bf16 = w.astype(jnp.bfloat16)                        # MXU operand, halves DMA
    b3 = b.reshape(num_layers, 1, hidden).astype(jnp.float32)

    kernel = functools.partial(_decoder_kernel, hidden=hidden,
                               num_layers=num_layers)

    flops = 2 * rows_p * hidden * hidden * num_layers \
        + 10 * rows_p * hidden * (num_layers + 1)
    bytes_accessed = (2 * rows_p * hidden * x.dtype.itemsize   # x in + out
                      + w_bf16.size * 2 + b3.size * 4 + ln_flat.size * 4)

    out2d = pl.pallas_call(
        kernel,
        out_shape=jax.ShapeDtypeStruct((rows_p, hidden), x.dtype),
        grid_spec=pltpu.PrefetchScalarGridSpec(
            num_scalar_prefetch=0,
            grid=(rows_p // tile_m,),
            in_specs=[
                # per-layer + final [alpha, bias] scalars (flat, SMEM)
                pl.BlockSpec(memory_space=pltpu.MemorySpace.SMEM),
                # row tile of x (lane-dense: hidden is the full last dim)
                pl.BlockSpec((tile_m, hidden), lambda i: (i, 0)),
                # stacked weights, grid-invariant (resident across grid steps)
                pl.BlockSpec((num_layers, hidden, hidden), lambda i: (0, 0, 0)),
                # stacked biases, grid-invariant
                pl.BlockSpec((num_layers, 1, hidden), lambda i: (0, 0, 0)),
            ],
            out_specs=pl.BlockSpec((tile_m, hidden), lambda i: (i, 0)),
        ),
        compiler_params=pltpu.CompilerParams(
            # Row tiles are independent -> shard across both v7x TensorCores.
            dimension_semantics=("parallel",),
            vmem_limit_bytes=64 * 1024 * 1024,
        ),
        cost_estimate=pl.CostEstimate(
            flops=flops,
            transcendentals=2 * rows_p * (num_layers + 1),  # sqrt + rcp per row/norm
            bytes_accessed=bytes_accessed,
        ),
    )(ln_flat, x2d, w_bf16, b3)

    return out2d[:rows].reshape(batch, seq, hidden)


if __name__ == "__main__":
    batch, seq, hidden, num_layers = 2, 8, 128, 2   # hidden multiple of 128 (lane-dense)

    key = jax.random.PRNGKey(0)
    kx, ke, kw, kb = jax.random.split(key, 4)

    x = jax.random.normal(kx, (batch, seq, hidden), dtype=jnp.float32)
    encoder_output = jax.random.normal(ke, (batch, seq, hidden), dtype=jnp.float32)
    src_mask = jnp.ones((batch, 1, 1, seq), dtype=jnp.float32)
    tgt_mask = jnp.tril(jnp.ones((batch, 1, seq, seq), dtype=jnp.float32))

    # LayerNormalization params (torch __init__: ones(1), zeros(1)) for each
    # stand-in layer plus the Decoder's final norm: columns are [alpha, bias].
    ln_ab = jnp.concatenate(
        [jnp.ones((num_layers + 1, 1), jnp.float32),
         jnp.zeros((num_layers + 1, 1), jnp.float32)], axis=1)

    # Deterministic stand-in layer params: Linear(hidden, hidden) per layer.
    w = jax.random.normal(kw, (num_layers, hidden, hidden), jnp.float32) / jnp.sqrt(hidden)
    b = 0.01 * jax.random.normal(kb, (num_layers, hidden), jnp.float32)

    out = decoder_forward(x, encoder_output, src_mask, tgt_mask, ln_ab, w, b)
    out = jax.block_until_ready(out)

    # Pure-JAX reference (same bf16 matmul operands, f32 accumulation).
    def ref_ln(v, a, bi):
        m = v.mean(-1, keepdims=True)
        d = v - m
        var = (d * d).sum(-1, keepdims=True) / (hidden - 1)
        return a * d / (jnp.sqrt(var) + EPS) + bi

    xr = x.astype(jnp.float32)
    for l in range(num_layers):
        y = ref_ln(xr, ln_ab[l, 0], ln_ab[l, 1])
        z = jnp.einsum("bsh,hk->bsk", y.astype(jnp.bfloat16),
                       w[l].astype(jnp.bfloat16),
                       preferred_element_type=jnp.float32) + b[l]
        xr = xr + z
    ref = ref_ln(xr, ln_ab[num_layers, 0], ln_ab[num_layers, 1])

    assert out.shape == (batch, seq, hidden)
    assert jnp.isfinite(out).all()
    assert jnp.allclose(out, ref, atol=5e-2, rtol=5e-2), \
        float(jnp.abs(out - ref).max())
    print("KERNEL_OK")
</pallas_src>

<mosaic_0001>
module attributes {stable_mosaic.version = 11 : i64} {
  func.func @_decoder_kernel(%arg0: i32, %arg1: memref<6xf32, #tpu.memory_space<smem>>, %arg2: memref<16x128xf32, #tpu.memory_space<vmem>>, %arg3: memref<2x128x128xbf16, #tpu.memory_space<vmem>>, %arg4: memref<2x1x128xf32, #tpu.memory_space<vmem>>, %arg5: memref<16x128xf32, #tpu.memory_space<vmem>>) attributes {dimension_semantics = [#tpu.dimension_semantics<parallel>], iteration_bounds = array<i64: 1>, scalar_prefetch = 0 : i64, scratch_operands = 0 : i64, tpu.core_type = #tpu.core_type<tc>, window_params = [{transform_indices = @transform_0, window_bounds = array<i64: 6>}, {transform_indices = @transform_1, window_bounds = array<i64: 16, 128>}, {pipeline_mode = #tpu.pipeline_mode<synchronous>, transform_indices = @transform_2, window_bounds = array<i64: 2, 128, 128>}, {pipeline_mode = #tpu.pipeline_mode<synchronous>, transform_indices = @transform_3, window_bounds = array<i64: 2, 1, 128>}, {transform_indices = @transform_4, window_bounds = array<i64: 16, 128>}]} {
    %c0 = arith.constant 0 : index
    %c0_0 = arith.constant 0 : index
    %0 = vector.load %arg2[%c0, %c0_0] : memref<16x128xf32, #tpu.memory_space<vmem>>, vector<16x128xf32>
    %c0_1 = arith.constant 0 : index
    %1 = memref.load %arg1[%c0_1] : memref<6xf32, #tpu.memory_space<smem>>
    %c1 = arith.constant 1 : index
    %2 = memref.load %arg1[%c1] : memref<6xf32, #tpu.memory_space<smem>>
    %cst = arith.constant dense<0.000000e+00> : vector<16xf32>
    %3 = vector.multi_reduction <add>, %0, %cst [1] : vector<16x128xf32> to vector<16xf32>
    %4 = vector.shape_cast %3 : vector<16xf32> to vector<16x1xf32>
    %cst_2 = arith.constant 1.280000e+02 : f32
    %5 = vector.broadcast %cst_2 : f32 to vector<16x1xf32>
    %6 = arith.divf %4, %5 : vector<16x1xf32>
    %7 = vector.broadcast %6 : vector<16x1xf32> to vector<16x128xf32>
    %8 = arith.subf %0, %7 : vector<16x128xf32>
    %9 = arith.mulf %8, %8 : vector<16x128xf32>
    %cst_3 = arith.constant dense<0.000000e+00> : vector<16xf32>
    %10 = vector.multi_reduction <add>, %9, %cst_3 [1] : vector<16x128xf32> to vector<16xf32>
    %11 = vector.shape_cast %10 : vector<16xf32> to vector<16x1xf32>
    %cst_4 = arith.constant 0.00787401571 : f32
    %12 = vector.broadcast %cst_4 : f32 to vector<16x1xf32>
    %13 = arith.mulf %11, %12 : vector<16x1xf32>
    %14 = math.sqrt %13 : vector<16x1xf32>
    %cst_5 = arith.constant 9.99999997E-7 : f32
    %15 = vector.broadcast %cst_5 : f32 to vector<16x1xf32>
    %16 = arith.addf %14, %15 : vector<16x1xf32>
    %17 = tpu.reciprocal %16 {approx = true} : vector<16x1xf32> -> vector<16x1xf32>
    %18 = vector.broadcast %1 : f32 to vector<16x1xf32>
    %19 = arith.mulf %18, %17 : vector<16x1xf32>
    %20 = vector.broadcast %19 : vector<16x1xf32> to vector<16x128xf32>
    %21 = arith.mulf %8, %20 : vector<16x128xf32>
    %22 = vector.broadcast %2 : f32 to vector<16x128xf32>
    %23 = arith.addf %21, %22 : vector<16x128xf32>
    %24 = arith.truncf %23 : vector<16x128xf32> to vector<16x128xbf16>
    %c0_6 = arith.constant 0 : index
    %c0_7 = arith.constant 0 : index
    %c0_8 = arith.constant 0 : index
    %25 = vector.load %arg3[%c0_6, %c0_7, %c0_8] : memref<2x128x128xbf16, #tpu.memory_space<vmem>>, vector<1x128x128xbf16>
    %26 = vector.shape_cast %25 : vector<1x128x128xbf16> to vector<128x128xbf16>
    %cst_9 = arith.constant dense<0.000000e+00> : vector<16x128xf32>
    %27 = tpu.matmul %24, %26, %cst_9 {dimension_numbers = #tpu.dot_dimension_numbers<[1], [0], [0], [1], [0, 0, 1, 1], [], []>} : vector<16x128xbf16>, vector<128x128xbf16>, vector<16x128xf32> -> vector<16x128xf32>
    %c0_10 = arith.constant 0 : index
    %c0_11 = arith.constant 0 : index
    %c0_12 = arith.constant 0 : index
    %28 = vector.load %arg4[%c0_10, %c0_11, %c0_12] : memref<2x1x128xf32, #tpu.memory_space<vmem>>, vector<1x1x128xf32>
    %29 = vector.shape_cast %28 : vector<1x1x128xf32> to vector<1x128xf32>
    %30 = vector.broadcast %29 : vector<1x128xf32> to vector<16x128xf32>
    %31 = arith.addf %27, %30 : vector<16x128xf32>
    %32 = arith.addf %0, %31 : vector<16x128xf32>
    %c2 = arith.constant 2 : index
    %33 = memref.load %arg1[%c2] : memref<6xf32, #tpu.memory_space<smem>>
    %c3 = arith.constant 3 : index
    %34 = memref.load %arg1[%c3] : memref<6xf32, #tpu.memory_space<smem>>
    %cst_13 = arith.constant dense<0.000000e+00> : vector<16xf32>
    %35 = vector.multi_reduction <add>, %32, %cst_13 [1] : vector<16x128xf32> to vector<16xf32>
    %36 = vector.shape_cast %35 : vector<16xf32> to vector<16x1xf32>
    %cst_14 = arith.constant 1.280000e+02 : f32
    %37 = vector.broadcast %cst_14 : f32 to vector<16x1xf32>
    %38 = arith.divf %36, %37 : vector<16x1xf32>
    %39 = vector.broadcast %38 : vector<16x1xf32> to vector<16x128xf32>
    %40 = arith.subf %32, %39 : vector<16x128xf32>
    %41 = arith.mulf %40, %40 : vector<16x128xf32>
    %cst_15 = arith.constant dense<0.000000e+00> : vector<16xf32>
    %42 = vector.multi_reduction <add>, %41, %cst_15 [1] : vector<16x128xf32> to vector<16xf32>
    %43 = vector.shape_cast %42 : vector<16xf32> to vector<16x1xf32>
    %cst_16 = arith.constant 0.00787401571 : f32
    %44 = vector.broadcast %cst_16 : f32 to vector<16x1xf32>
    %45 = arith.mulf %43, %44 : vector<16x1xf32>
    %46 = math.sqrt %45 : vector<16x1xf32>
    %cst_17 = arith.constant 9.99999997E-7 : f32
    %47 = vector.broadcast %cst_17 : f32 to vector<16x1xf32>
    %48 = arith.addf %46, %47 : vector<16x1xf32>
    %49 = tpu.reciprocal %48 {approx = true} : vector<16x1xf32> -> vector<16x1xf32>
    %50 = vector.broadcast %33 : f32 to vector<16x1xf32>
    %51 = arith.mulf %50, %49 : vector<16x1xf32>
    %52 = vector.broadcast %51 : vector<16x1xf32> to vector<16x128xf32>
    %53 = arith.mulf %40, %52 : vector<16x128xf32>
    %54 = vector.broadcast %34 : f32 to vector<16x128xf32>
    %55 = arith.addf %53, %54 : vector<16x128xf32>
    %56 = arith.truncf %55 : vector<16x128xf32> to vector<16x128xbf16>
    %c1_18 = arith.constant 1 : index
    %c0_19 = arith.constant 0 : index
    %c0_20 = arith.constant 0 : index
    %57 = vector.load %arg3[%c1_18, %c0_19, %c0_20] : memref<2x128x128xbf16, #tpu.memory_space<vmem>>, vector<1x128x128xbf16>
    %58 = vector.shape_cast %57 : vector<1x128x128xbf16> to vector<128x128xbf16>
    %cst_21 = arith.constant dense<0.000000e+00> : vector<16x128xf32>
    %59 = tpu.matmul %56, %58, %cst_21 {dimension_numbers = #tpu.dot_dimension_numbers<[1], [0], [0], [1], [0, 0, 1, 1], [], []>} : vector<16x128xbf16>, vector<128x128xbf16>, vector<16x128xf32> -> vector<16x128xf32>
    %c1_22 = arith.constant 1 : index
    %c0_23 = arith.constant 0 : index
    %c0_24 = arith.constant 0 : index
    %60 = vector.load %arg4[%c1_22, %c0_23, %c0_24] : memref<2x1x128xf32, #tpu.memory_space<vmem>>, vector<1x1x128xf32>
    %61 = vector.shape_cast %60 : vector<1x1x128xf32> to vector<1x128xf32>
    %62 = vector.broadcast %61 : vector<1x128xf32> to vector<16x128xf32>
    %63 = arith.addf %59, %62 : vector<16x128xf32>
    %64 = arith.addf %32, %63 : vector<16x128xf32>
    %c4 = arith.constant 4 : index
    %65 = memref.load %arg1[%c4] : memref<6xf32, #tpu.memory_space<smem>>
    %c5 = arith.constant 5 : index
    %66 = memref.load %arg1[%c5] : memref<6xf32, #tpu.memory_space<smem>>
    %cst_25 = arith.constant dense<0.000000e+00> : vector<16xf32>
    %67 = vector.multi_reduction <add>, %64, %cst_25 [1] : vector<16x128xf32> to vector<16xf32>
    %68 = vector.shape_cast %67 : vector<16xf32> to vector<16x1xf32>
    %cst_26 = arith.constant 1.280000e+02 : f32
    %69 = vector.broadcast %cst_26 : f32 to vector<16x1xf32>
    %70 = arith.divf %68, %69 : vector<16x1xf32>
    %71 = vector.broadcast %70 : vector<16x1xf32> to vector<16x128xf32>
    %72 = arith.subf %64, %71 : vector<16x128xf32>
    %73 = arith.mulf %72, %72 : vector<16x128xf32>
    %cst_27 = arith.constant dense<0.000000e+00> : vector<16xf32>
    %74 = vector.multi_reduction <add>, %73, %cst_27 [1] : vector<16x128xf32> to vector<16xf32>
    %75 = vector.shape_cast %74 : vector<16xf32> to vector<16x1xf32>
    %cst_28 = arith.constant 0.00787401571 : f32
    %76 = vector.broadcast %cst_28 : f32 to vector<16x1xf32>
    %77 = arith.mulf %75, %76 : vector<16x1xf32>
    %78 = math.sqrt %77 : vector<16x1xf32>
    %cst_29 = arith.constant 9.99999997E-7 : f32
    %79 = vector.broadcast %cst_29 : f32 to vector<16x1xf32>
    %80 = arith.addf %78, %79 : vector<16x1xf32>
    %81 = tpu.reciprocal %80 {approx = true} : vector<16x1xf32> -> vector<16x1xf32>
    %82 = vector.broadcast %65 : f32 to vector<16x1xf32>
    %83 = arith.mulf %82, %81 : vector<16x1xf32>
    %84 = vector.broadcast %83 : vector<16x1xf32> to vector<16x128xf32>
    %85 = arith.mulf %72, %84 : vector<16x128xf32>
    %86 = vector.broadcast %66 : f32 to vector<16x128xf32>
    %87 = arith.addf %85, %86 : vector<16x128xf32>
    %c0_30 = arith.constant 0 : index
    %c0_31 = arith.constant 0 : index
    %88 = vector.load %arg5[%c0_30, %c0_31] : memref<16x128xf32, #tpu.memory_space<vmem>>, vector<16x128xf32>
    tpu.vector_store %arg5[%c0_30, %c0_31], %87 {strides = array<i32>} : memref<16x128xf32, #tpu.memory_space<vmem>>, vector<16x128xf32>,
    return
  }
  func.func @transform_0(%arg0: i32) -> i32 {
    %c0_i32 = arith.constant 0 : i32
    %c0_i32_0 = arith.constant 0 : i32
    return %c0_i32 : i32
  }
  func.func @transform_1(%arg0: i32) -> (i32, i32) {
    %c0_i32 = arith.constant 0 : i32
    %c0_i32_0 = arith.constant 0 : i32
    return %arg0, %c0_i32 : i32, i32
  }
  func.func @transform_2(%arg0: i32) -> (i32, i32, i32) {
    %c0_i32 = arith.constant 0 : i32
    %c0_i32_0 = arith.constant 0 : i32
    %c0_i32_1 = arith.constant 0 : i32
    %c0_i32_2 = arith.constant 0 : i32
    return %c0_i32, %c0_i32_0, %c0_i32_1 : i32, i32, i32
  }
  func.func @transform_3(%arg0: i32) -> (i32, i32, i32) {
    %c0_i32 = arith.constant 0 : i32
    %c0_i32_0 = arith.constant 0 : i32
    %c0_i32_1 = arith.constant 0 : i32
    %c0_i32_2 = arith.constant 0 : i32
    return %c0_i32, %c0_i32_0, %c0_i32_1 : i32, i32, i32
  }
  func.func @transform_4(%arg0: i32) -> (i32, i32) {
    %c0_i32 = arith.constant 0 : i32
    %c0_i32_0 = arith.constant 0 : i32
    return %arg0, %c0_i32 : i32, i32
  }
}

</mosaic_0001>

<llo_original>
// kernel: tpu_custom_call.1
$region0: #{tpu_custom_call.1}
  #allocation0 [shape = 'u32[]', space=smem, size = 0x4, offset = 0x4, fixed_abs, tag = 'smem constant byte address 0x4 - core index']
  #allocation1 [shape = 'u32[144,128]{1,0:T(1,128)}', space=vmem, size = 0x12000, scoped, tag = 'internal scratch']
  %s0 = inlined_call_operand.hbm [shape: f32[6], index: 0, kind: input, shape index: {}]
  %s1 = inlined_call_operand.hbm [shape: f32[16,128], index: 1, kind: input, shape index: {}]
  %s2 = inlined_call_operand.hbm [shape: bf16[2,128,128], index: 2, kind: input, shape index: {}]
  %s3 = inlined_call_operand.hbm [shape: f32[2,1,128], index: 3, kind: input, shape index: {}]
  %s4 = inlined_call_operand.hbm [shape: f32[16,128], index: 4, kind: output, shape index: {}]
  %s5 = sld [smem:[#allocation0]]
  $region42: #{tpu_custom_call.1} parent=0
    _
  %s7 = ssub.s32 1, %s5
  %s8 = scalar_select 0, %s7, %s5
  $region1: #{tpu_custom_call.1} parent=0
    #allocation2 [shape = 'u8[512]{0}', space=smem, size = 0x200, scoped, tag = 'input window, operand 0, single buffered']
    #allocation3 [shape = 's32[1]{0}', space=sflag, size = 0x4, scoped, tag = 'scoped memory for tpu_custom_call.1']
    #allocation4 [shape = 's32[1]{0}', space=sflag, size = 0x4, scoped, tag = 'scoped memory for tpu_custom_call.1']
    #allocation5 [shape = 's32[1]{0}', space=sflag, size = 0x4, scoped, tag = 'scoped memory for tpu_custom_call.1']
    #allocation6 [shape = 'u8[8192]{0}', space=vmem, size = 0x2000, scoped, tag = 'input window, operand 1, single buffered']
    #allocation7 [shape = 'u8[65536]{0}', space=vmem, size = 0x10000, scoped, tag = 'input window, operand 2, single buffered']
    #allocation8 [shape = 's32[1]{0}', space=sflag, size = 0x4, scoped, tag = 'scoped memory for tpu_custom_call.1']
    #allocation9 [shape = 'u8[1024]{0}', space=vmem, size = 0x400, scoped, tag = 'input window, operand 3, single buffered']
    #allocation10 [shape = 'u8[8192]{0}', space=vmem, size = 0x2000, scoped, tag = 'output window, operand 0, single buffered']
    %9 = vsyncpa [#allocation5], 0
    %10 = vsyncpa [#allocation3], 0
    %11 = vsyncpa [#allocation8], 0
    %12 = vsyncpa [#allocation4], 0
    // Predicated region
    $region2: #{tpu_custom_call.1} parent=1 // pred_check
      _
    $region3: #{tpu_custom_call.1} parent=1 // pred_check_branch
      %14 = sbr.rel (0) target = $region5
    $region4: #{tpu_custom_call.1} parent=1 // pred_region
      %s16 = ssub.s32 16, 16
      %17 = vsyncadd [#allocation5], %s16
      %20 = dma.hbm_to_smem %s0, 16, [#allocation2], [#allocation5]
    $region5: #{tpu_custom_call.1} parent=1 // pred_fallthru
      _
    // Predicated region
    $region6: #{tpu_custom_call.1} parent=1 // pred_check
      _
    $region7: #{tpu_custom_call.1} parent=1 // pred_check_branch
      %22 = sbr.rel (0) target = $region9
    $region8: #{tpu_custom_call.1} parent=1 // pred_region
      %s24 = ssub.s32 256, 256
      %25 = vsyncadd [#allocation3], %s24
      %s26 = sshll.u32 [#allocation6], 4
      %s27 = int_to_ptr.vmem [resolvable:$true] %s26
      %32 = dma.hbm_to_vmem [thread:$0]  %s1, 256, %s27, [#allocation3], 128, 128, 8
    $region9: #{tpu_custom_call.1} parent=1 // pred_fallthru
      _
    // Predicated region
    $region10: #{tpu_custom_call.1} parent=1 // pred_check
      _
    $region11: #{tpu_custom_call.1} parent=1 // pred_check_branch
      %34 = sbr.rel (0) target = $region13
    $region12: #{tpu_custom_call.1} parent=1 // pred_region
      %s36 = ssub.s32 2048, 2048
      %37 = vsyncadd [#allocation8], %s36
      %s38 = sshll.u32 [#allocation7], 4
      %s39 = int_to_ptr.vmem [resolvable:$true] %s38
      %44 = dma.hbm_to_vmem [thread:$0]  %s2, 2048, %s39, [#allocation8], 64, 64, 4
    $region13: #{tpu_custom_call.1} parent=1 // pred_fallthru
      _
    // Predicated region
    $region14: #{tpu_custom_call.1} parent=1 // pred_check
      _
    $region15: #{tpu_custom_call.1} parent=1 // pred_check_branch
      %46 = sbr.rel (0) target = $region17
    $region16: #{tpu_custom_call.1} parent=1 // pred_region
      %s48 = ssub.s32 32, 32
      %49 = vsyncadd [#allocation8], %s48
      %s50 = sshll.u32 [#allocation9], 4
      %s51 = int_to_ptr.vmem [resolvable:$true] %s50
      %56 = dma.hbm_to_vmem [thread:$0]  %s3, 32, %s51, [#allocation8], 16, 16, 1
    $region17: #{tpu_custom_call.1} parent=1 // pred_fallthru
      _
    // Predicated region
    $region18: #{tpu_custom_call.1} parent=1 // pred_check
      _
    $region19: #{tpu_custom_call.1} parent=1 // pred_check_branch
      %58 = sbr.rel (0) target = $region21
    $region20: #{tpu_custom_call.1} parent=1 // pred_region
      %59 = dma.done [#allocation5], 16
    $region21: #{tpu_custom_call.1} parent=1 // pred_fallthru
      _
    // Predicated region
    $region22: #{tpu_custom_call.1} parent=1 // pred_check
      _
    $region23: #{tpu_custom_call.1} parent=1 // pred_check_branch
      %61 = sbr.rel (0) target = $region25
    $region24: #{tpu_custom_call.1} parent=1 // pred_region
      %62 = dma.done [#allocation3], 256
    $region25: #{tpu_custom_call.1} parent=1 // pred_fallthru
      _
    // Predicated region
    $region26: #{tpu_custom_call.1} parent=1 // pred_check
      _
    $region27: #{tpu_custom_call.1} parent=1 // pred_check_branch
      %64 = sbr.rel (0) target = $region29
    $region28: #{tpu_custom_call.1} parent=1 // pred_region
      %65 = dma.done [#allocation8], 2048
    $region29: #{tpu_custom_call.1} parent=1 // pred_fallthru
      _
    // Predicated region
    $region30: #{tpu_custom_call.1} parent=1 // pred_check
      _
    $region31: #{tpu_custom_call.1} parent=1 // pred_check_branch
      %67 = sbr.rel (0) target = $region33
    $region32: #{tpu_custom_call.1} parent=1 // pred_region
      %68 = dma.done [#allocation8], 32
    $region33: #{tpu_custom_call.1} parent=1 // pred_fallthru
      _
    %69 = sfence
    %v71 = vld [vmem:[#allocation6] sm:$0xff]
    %v72 = vld [vmem:[#allocation6 + $0x8] sm:$0xff]
    %s73 = sld [smem:[#allocation2]]
    %s74 = sld [smem:[#allocation2 + $0x1]]
    %75 = vadd.xlane.f32.xlu0 %v71
    %v76 = vpop.xlane.xlu0 %75
    %77 = vadd.xlane.f32.xlu0 %v72
    %v78 = vpop.xlane.xlu0 %77
    %v79 = vrcp.pop 128.0
    %v80 = vmul.f32 %v76, %v79
    %v81 = vmul.f32 %v78, %v79
    %v82 = vsub.f32 %v71, %v80
    %v83 = vsub.f32 %v72, %v81
    %v84 = vmul.f32 %v82, %v82
    %v85 = vmul.f32 %v83, %v83
    %86 = vadd.xlane.f32.xlu0 %v84
    %v87 = vpop.xlane.xlu0 %86
    %88 = vadd.xlane.f32.xlu0 %v85
    %v89 = vpop.xlane.xlu0 %88
    %v90 = vmul.f32 %v87, 0.007874016
    %v91 = vmul.f32 %v89, 0.007874016
    %v92 = vrsqrt.pop %v90
    %v93 = vmul.f32 %v90, %v92
    %vm94 = vcmp.eq.f32.partialorder %v90, inf
    %v95 = vsel %vm94, %v90, %v93
    %vm96 = vcmp.eq.f32.partialorder %v90, 0.0
    %v97 = vand.u32 %v90, 2147483648
    %v98 = vsel %vm96, %v97, %v95
    %v99 = vrsqrt.pop %v91
    %v100 = vmul.f32 %v91, %v99
    %vm101 = vcmp.eq.f32.partialorder %v91, inf
    %v102 = vsel %vm101, %v91, %v100
    %vm103 = vcmp.eq.f32.partialorder %v91, 0.0
    %v104 = vand.u32 %v91, 2147483648
    %v105 = vsel %vm103, %v104, %v102
    %v106 = vadd.f32 %v98, 1e-06
    %v107 = vadd.f32 %v105, 1e-06
    %v108 = vrcp.pop %v106
    %v109 = vrcp.pop %v107
    %v110 = vstv %s73
    %v111 = vmul.f32 %v110, %v108
    %v112 = vmul.f32 %v110, %v109
    %v113 = vmul.f32 %v82, %v111
    %v114 = vmul.f32 %v83, %v112
    %v115 = vstv %s74
    %v116 = vadd.f32 %v113, %v115
    %v117 = vadd.f32 %v114, %v115
    %v118 = vpack.c.bf16 %v117, %v116
    %v119 = vld [vmem:[#allocation7] sm:$0xf]
    %v120 = vld [vmem:[#allocation7 + $0x4] sm:$0xf]
    %v121 = vld [vmem:[#allocation7 + $0x8] sm:$0xf]
    %v122 = vld [vmem:[#allocation7 + $0xc] sm:$0xf]
    %v123 = vld [vmem:[#allocation7 + $0x10] sm:$0xf]
    %v124 = vld [vmem:[#allocation7 + $0x14] sm:$0xf]
    %v125 = vld [vmem:[#allocation7 + $0x18] sm:$0xf]
    %v126 = vld [vmem:[#allocation7 + $0x1c] sm:$0xf]
    %v127 = vld [vmem:[#allocation7 + $0x20] sm:$0xf]
    %v128 = vld [vmem:[#allocation7 + $0x24] sm:$0xf]
    %v129 = vld [vmem:[#allocation7 + $0x28] sm:$0xf]
    %v130 = vld [vmem:[#allocation7 + $0x2c] sm:$0xf]
    %v131 = vld [vmem:[#allocation7 + $0x30] sm:$0xf]
    %v132 = vld [vmem:[#allocation7 + $0x34] sm:$0xf]
    %v133 = vld [vmem:[#allocation7 + $0x38] sm:$0xf]
    %v134 = vld [vmem:[#allocation7 + $0x3c] sm:$0xf]
    %v135 = vld [vmem:[#allocation9] sm:$0x1]
    %v137 = vlaneseq
    %v138 = vshrl.u32 %v137, 7
    %v139 = vsub.s32 0, %v138
    %v140 = vrot.slane %v135, %v139
    %v158 = vunpack.c.l.b16 %v119
    %v159 = vunpack.c.l.b16 %v120
    %v160 = vunpack.c.l.b16 %v121
    %v161 = vunpack.c.l.b16 %v122
    %v162 = vunpack.c.l.b16 %v123
    %v163 = vunpack.c.l.b16 %v124
    %v164 = vunpack.c.l.b16 %v125
    %v165 = vunpack.c.l.b16 %v126
    %v166 = vunpack.c.l.b16 %v127
    %v167 = vunpack.c.l.b16 %v128
    %v168 = vunpack.c.l.b16 %v129
    %v169 = vunpack.c.l.b16 %v130
    %v170 = vunpack.c.l.b16 %v131
    %v171 = vunpack.c.l.b16 %v132
    %v172 = vunpack.c.l.b16 %v133
    %v173 = vunpack.c.l.b16 %v134
    %v174 = vpack.c.b16 %v159, %v158
    %v175 = vpack.c.b16 %v161, %v160
    %v176 = vpack.c.b16 %v163, %v162
    %v177 = vpack.c.b16 %v165, %v164
    %v178 = vpack.c.b16 %v167, %v166
    %v179 = vpack.c.b16 %v169, %v168
    %v180 = vpack.c.b16 %v171, %v170
    %v181 = vpack.c.b16 %v173, %v172
    %190 = vmatprep.subr.bf16.mxu0 0
    %191 = vmatpush1.bf16.msra.mxu0 %v174
    %192 = vmatprep.subr.bf16.mxu0 0
    %193 = vmatpush1.bf16.msra.mxu0 %v175
    %194 = vmatprep.subr.bf16.mxu0 0
    %195 = vmatpush1.bf16.msra.mxu0 %v176
    %196 = vmatprep.subr.bf16.mxu0 0
    %197 = vmatpush1.bf16.msra.mxu0 %v177
    %198 = vmatprep.subr.bf16.mxu0 0
    %199 = vmatpush1.bf16.msra.mxu0 %v178
    %200 = vmatprep.subr.bf16.mxu0 0
    %201 = vmatpush1.bf16.msra.mxu0 %v179
    %202 = vmatprep.subr.bf16.mxu0 0
    %203 = vmatpush1.bf16.msra.mxu0 %v180
    %204 = vmatprep.subr.bf16.mxu0 0
    %205 = vmatpush1.bf16.msra.mxu0 %v181
    %206 = vmatprep.subr.bf16.mxu0 0
    %207 = vmatpush1.bf16.msra.mxu0 0
    %208 = vmatprep.subr.bf16.mxu0 0
    %209 = vmatpush1.bf16.msra.mxu0 0
    %210 = vmatprep.subr.bf16.mxu0 0
    %211 = vmatpush1.bf16.msra.mxu0 0
    %212 = vmatprep.subr.bf16.mxu0 0
    %213 = vmatpush1.bf16.msra.mxu0 0
    %214 = vmatprep.subr.bf16.mxu0 0
    %215 = vmatpush1.bf16.msra.mxu0 0
    %216 = vmatprep.subr.bf16.mxu0 0
    %217 = vmatpush1.bf16.msra.mxu0 0
    %218 = vmatprep.subr.bf16.mxu0 0
    %219 = vmatpush1.bf16.msra.mxu0 0
    %220 = vmatprep.subr.bf16.mxu0 0
    %221 = vmatpush1.bf16.msra.mxu0 0
    %222 = vmatprep.mubr.bf16.mxu0 0
    %223 = vmatmul.mubr.bf16.gmra.mrb[0].mxu0 %v118
    %v224 = vpop.f32.mrb[0].mxu0
    %v225 = vadd.f32 %v140, %v224
    %v226 = vpop.f32.mrb[0].mxu0
    %v227 = vpop.f32.mrb[0].mxu0
    %v228 = vadd.f32 %v140, %v227
    %v229 = vpop.f32.mrb[0].mxu0
    %230 = vdwg.mxu0
    %v231 = vadd.f32 %v71, %v225
    %v232 = vadd.f32 %v72, %v228
    %s233 = sld [smem:[#allocation2 + $0x2]]
    %s234 = sld [smem:[#allocation2 + $0x3]]
    %235 = vadd.xlane.f32.xlu0 %v231
    %v236 = vpop.xlane.xlu0 %235
    %237 = vadd.xlane.f32.xlu0 %v232
    %v238 = vpop.xlane.xlu0 %237
    %v239 = vmul.f32 %v236, %v79
    %v240 = vmul.f32 %v238, %v79
    %v241 = vsub.f32 %v231, %v239
    %v242 = vsub.f32 %v232, %v240
    %v243 = vmul.f32 %v241, %v241
    %v244 = vmul.f32 %v242, %v242
    %245 = vadd.xlane.f32.xlu0 %v243
    %v246 = vpop.xlane.xlu0 %245
    %247 = vadd.xlane.f32.xlu0 %v244
    %v248 = vpop.xlane.xlu0 %247
    %v249 = vmul.f32 %v246, 0.007874016
    %v250 = vmul.f32 %v248, 0.007874016
    %v251 = vrsqrt.pop %v249
    %v252 = vmul.f32 %v249, %v251
    %vm253 = vcmp.eq.f32.partialorder %v249, inf
    %v254 = vsel %vm253, %v249, %v252
    %vm255 = vcmp.eq.f32.partialorder %v249, 0.0
    %v256 = vand.u32 %v249, 2147483648
    %v257 = vsel %vm255, %v256, %v254
    %v258 = vrsqrt.pop %v250
    %v259 = vmul.f32 %v250, %v258
    %vm260 = vcmp.eq.f32.partialorder %v250, inf
    %v261 = vsel %vm260, %v250, %v259
    %vm262 = vcmp.eq.f32.partialorder %v250, 0.0
    %v263 = vand.u32 %v250, 2147483648
    %v264 = vsel %vm262, %v263, %v261
    %v265 = vadd.f32 %v257, 1e-06
    %v266 = vadd.f32 %v264, 1e-06
    %v267 = vrcp.pop %v265
    %v268 = vrcp.pop %v266
    %v269 = vstv %s233
    %v270 = vmul.f32 %v269, %v267
    %v271 = vmul.f32 %v269, %v268
    %v272 = vmul.f32 %v241, %v270
    %v273 = vmul.f32 %v242, %v271
    %v274 = vstv %s234
    %v275 = vadd.f32 %v272, %v274
    %v276 = vadd.f32 %v273, %v274
    %v277 = vpack.c.bf16 %v276, %v275
    %s278 = scalar_lea.vmem [#allocation7], 64
    %v279 = vld [vmem:[%s278] sm:$0xf]
    %v280 = vld [vmem:[%s278 + $0x4] sm:$0xf]
    %v281 = vld [vmem:[%s278 + $0x8] sm:$0xf]
    %v282 = vld [vmem:[%s278 + $0xc] sm:$0xf]
    %v283 = vld [vmem:[%s278 + $0x10] sm:$0xf]
    %v284 = vld [vmem:[%s278 + $0x14] sm:$0xf]
    %v285 = vld [vmem:[%s278 + $0x18] sm:$0xf]
    %v286 = vld [vmem:[%s278 + $0x1c] sm:$0xf]
    %v287 = vld [vmem:[%s278 + $0x20] sm:$0xf]
    %v288 = vld [vmem:[%s278 + $0x24] sm:$0xf]
    %v289 = vld [vmem:[%s278 + $0x28] sm:$0xf]
    %v290 = vld [vmem:[%s278 + $0x2c] sm:$0xf]
    %v291 = vld [vmem:[%s278 + $0x30] sm:$0xf]
    %v292 = vld [vmem:[%s278 + $0x34] sm:$0xf]
    %v293 = vld [vmem:[%s278 + $0x38] sm:$0xf]
    %v294 = vld [vmem:[%s278 + $0x3c] sm:$0xf]
    %s295 = scalar_lea.vmem [#allocation9], 1
    %v296 = vld [vmem:[%s295] sm:$0x1]
    %v298 = vlaneseq
    %v299 = vshrl.u32 %v298, 7
    %v300 = vsub.s32 0, %v299
    %v301 = vrot.slane %v296, %v300
    %v319 = vunpack.c.l.b16 %v279
    %v320 = vunpack.c.l.b16 %v280
    %v321 = vunpack.c.l.b16 %v281
    %v322 = vunpack.c.l.b16 %v282
    %v323 = vunpack.c.l.b16 %v283
    %v324 = vunpack.c.l.b16 %v284
    %v325 = vunpack.c.l.b16 %v285
    %v326 = vunpack.c.l.b16 %v286
    %v327 = vunpack.c.l.b16 %v287
    %v328 = vunpack.c.l.b16 %v288
    %v329 = vunpack.c.l.b16 %v289
    %v330 = vunpack.c.l.b16 %v290
    %v331 = vunpack.c.l.b16 %v291
    %v332 = vunpack.c.l.b16 %v292
    %v333 = vunpack.c.l.b16 %v293
    %v334 = vunpack.c.l.b16 %v294
    %v335 = vpack.c.b16 %v320, %v319
    %v336 = vpack.c.b16 %v322, %v321
    %v337 = vpack.c.b16 %v324, %v323
    %v338 = vpack.c.b16 %v326, %v325
    %v339 = vpack.c.b16 %v328, %v327
    %v340 = vpack.c.b16 %v330, %v329
    %v341 = vpack.c.b16 %v332, %v331
    %v342 = vpack.c.b16 %v334, %v333
    %351 = vmatprep.subr.bf16.mxu0 0
    %352 = vmatpush1.bf16.msra.mxu0 %v335
    %353 = vmatprep.subr.bf16.mxu0 0
    %354 = vmatpush1.bf16.msra.mxu0 %v336
    %355 = vmatprep.subr.bf16.mxu0 0
    %356 = vmatpush1.bf16.msra.mxu0 %v337
    %357 = vmatprep.subr.bf16.mxu0 0
    %358 = vmatpush1.bf16.msra.mxu0 %v338
    %359 = vmatprep.subr.bf16.mxu0 0
    %360 = vmatpush1.bf16.msra.mxu0 %v339
    %361 = vmatprep.subr.bf16.mxu0 0
    %362 = vmatpush1.bf16.msra.mxu0 %v340
    %363 = vmatprep.subr.bf16.mxu0 0
    %364 = vmatpush1.bf16.msra.mxu0 %v341
    %365 = vmatprep.subr.bf16.mxu0 0
    %366 = vmatpush1.bf16.msra.mxu0 %v342
    %367 = vmatprep.subr.bf16.mxu0 0
    %368 = vmatpush1.bf16.msra.mxu0 0
    %369 = vmatprep.subr.bf16.mxu0 0
    %370 = vmatpush1.bf16.msra.mxu0 0
    %371 = vmatprep.subr.bf16.mxu0 0
    %372 = vmatpush1.bf16.msra.mxu0 0
    %373 = vmatprep.subr.bf16.mxu0 0
    %374 = vmatpush1.bf16.msra.mxu0 0
    %375 = vmatprep.subr.bf16.mxu0 0
    %376 = vmatpush1.bf16.msra.mxu0 0
    %377 = vmatprep.subr.bf16.mxu0 0
    %378 = vmatpush1.bf16.msra.mxu0 0
    %379 = vmatprep.subr.bf16.mxu0 0
    %380 = vmatpush1.bf16.msra.mxu0 0
    %381 = vmatprep.subr.bf16.mxu0 0
    %382 = vmatpush1.bf16.msra.mxu0 0
    %383 = vmatprep.mubr.bf16.mxu0 0
    %384 = vmatmul.mubr.bf16.gmra.mrb[0].mxu0 %v277
    %v385 = vpop.f32.mrb[0].mxu0
    %v386 = vadd.f32 %v301, %v385
    %v387 = vpop.f32.mrb[0].mxu0
    %v388 = vpop.f32.mrb[0].mxu0
    %v389 = vadd.f32 %v301, %v388
    %v390 = vpop.f32.mrb[0].mxu0
    %391 = vdwg.mxu0
    %v392 = vadd.f32 %v231, %v386
    %v393 = vadd.f32 %v232, %v389
    %s394 = sld [smem:[#allocation2 + $0x4]]
    %s395 = sld [smem:[#allocation2 + $0x5]]
    %396 = vadd.xlane.f32.xlu0 %v392
    %v397 = vpop.xlane.xlu0 %396
    %398 = vadd.xlane.f32.xlu0 %v393
    %v399 = vpop.xlane.xlu0 %398
    %v400 = vmul.f32 %v397, %v79
    %v401 = vmul.f32 %v399, %v79
    %v402 = vsub.f32 %v392, %v400
    %v403 = vsub.f32 %v393, %v401
    %v404 = vmul.f32 %v402, %v402
    %v405 = vmul.f32 %v403, %v403
    %406 = vadd.xlane.f32.xlu0 %v404
    %v407 = vpop.xlane.xlu0 %406
    %408 = vadd.xlane.f32.xlu0 %v405
    %v409 = vpop.xlane.xlu0 %408
    %v410 = vmul.f32 %v407, 0.007874016
    %v411 = vmul.f32 %v409, 0.007874016
    %v412 = vrsqrt.pop %v410
    %v413 = vmul.f32 %v410, %v412
    %vm414 = vcmp.eq.f32.partialorder %v410, inf
    %v415 = vsel %vm414, %v410, %v413
    %vm416 = vcmp.eq.f32.partialorder %v410, 0.0
    %v417 = vand.u32 %v410, 2147483648
    %v418 = vsel %vm416, %v417, %v415
    %v419 = vrsqrt.pop %v411
    %v420 = vmul.f32 %v411, %v419
    %vm421 = vcmp.eq.f32.partialorder %v411, inf
    %v422 = vsel %vm421, %v411, %v420
    %vm423 = vcmp.eq.f32.partialorder %v411, 0.0
    %v424 = vand.u32 %v411, 2147483648
    %v425 = vsel %vm423, %v424, %v422
    %v426 = vadd.f32 %v418, 1e-06
    %v427 = vadd.f32 %v425, 1e-06
    %v428 = vrcp.pop %v426
    %v429 = vrcp.pop %v427
    %v430 = vstv %s394
    %v431 = vmul.f32 %v430, %v428
    %v432 = vmul.f32 %v430, %v429
    %v433 = vmul.f32 %v402, %v431
    %v434 = vmul.f32 %v403, %v432
    %v435 = vstv %s395
    %v436 = vadd.f32 %v433, %v435
    %v437 = vadd.f32 %v434, %v435
    %438 = vst [vmem:[#allocation10] sm:$0xff] %v436
    %439 = vst [vmem:[#allocation10 + $0x8] sm:$0xff] %v437
    // Predicated region
    $region34: #{tpu_custom_call.1} parent=1 // pred_check
      _
    $region35: #{tpu_custom_call.1} parent=1 // pred_check_branch
      %441 = sbr.rel (0) target = $region37
    $region36: #{tpu_custom_call.1} parent=1 // pred_region
      %s443 = ssub.s32 256, 256
      %444 = vsyncadd [#allocation4], %s443
      %s445 = sshll.u32 [#allocation10], 4
      %s446 = int_to_ptr.vmem [resolvable:$true] %s445
      %451 = dma.vmem_to_hbm [thread:$0]  %s446, 256, %s4, [#allocation4], 128, 128, 8
    $region37: #{tpu_custom_call.1} parent=1 // pred_fallthru
      _
    // Predicated region
    $region38: #{tpu_custom_call.1} parent=1 // pred_check
      _
    $region39: #{tpu_custom_call.1} parent=1 // pred_check_branch
      %453 = sbr.rel (0) target = $region41
    $region40: #{tpu_custom_call.1} parent=1 // pred_region
      %454 = dma.done [#allocation4], 256
    $region41: #{tpu_custom_call.1} parent=1 // pred_fallthru
      _
    %455 = vsyncpa [#allocation3], 1
    %456 = vsyncpa [#allocation8], 1
    %457 = vsyncpa [#allocation4], 1
    %458 = vsyncpa [#allocation5], 1

</llo_original>
